<compile_context>
chip_gen: v7x
topology: tpu7x:2x2x1
jax: 0.10.0
libtpu: 0.0.40
codegen_flags: <defaults>
</compile_context>

<pallas_src>
import functools
import math

import numpy as np
import jax
import jax.numpy as jnp
from jax.experimental import pallas as pl
from jax.experimental.pallas import tpu as pltpu

_LANE = 128
_SUBLANE = 8


def _round_up(x, m):
    return (x + m - 1) // m * m


def _ensemble_kernel(x_ref, w_ref, b_ref, out_ref, *,
                     num_layers, inv_num_net, compute_dtype):
    """All ensemble members packed along the lane axis; one dot per layer."""
    h = x_ref[...]                                   # f32 (batch_p, P)
    for d in range(num_layers):                      # static unrolled loop
        h = jnp.dot(h.astype(compute_dtype), w_ref[d],
                    preferred_element_type=jnp.float32) + b_ref[d]
        if d < num_layers - 1:                       # no ReLU after output layer
            h = jnp.maximum(h, 0.0)
    # Packed output weights select the mean head of every net and sum them
    # along the packed K axis; one f32 scale gives the ensemble mean.
    out_ref[...] = h * jnp.float32(inv_num_net)


def _pack_params_np(params, output_dim, weight_dtype):
    """One-time, host-side re-layout into 2 slabs (weights + biases)."""
    w_in, b_in, w_h, b_h, w_out, b_out = (
        np.asarray(jax.device_get(p), dtype=np.float32) for p in params)
    num_net, input_dim, hidden_dim = w_in.shape
    hidden_depth = w_h.shape[1]
    assert output_dim <= _LANE, "output head must fit in one lane tile"

    P = _round_up(max(num_net * hidden_dim, input_dim, output_dim), _LANE)
    L = hidden_depth + 2                              # input + hidden + output

    w_stack = np.zeros((L, P, P), np.float32)
    b_stack = np.zeros((L, 1, P), np.float32)
    for n in range(num_net):
        s = n * hidden_dim
        # input layer (x is lane-zero-padded beyond input_dim, zero rows here)
        w_stack[0, :input_dim, s:s + hidden_dim] = w_in[n]
        b_stack[0, 0, s:s + hidden_dim] = b_in[n, 0]
        # hidden layers: block-diagonal
        for d in range(hidden_depth):
            w_stack[1 + d, s:s + hidden_dim, s:s + hidden_dim] = w_h[n, d]
            b_stack[1 + d, 0, s:s + hidden_dim] = b_h[n, d, 0]
        # output layer: keep only the mean head (hetero_noise_est=True)
        w_stack[L - 1, s:s + hidden_dim, :output_dim] = w_out[n, :, :output_dim]
        b_stack[L - 1, 0, :output_dim] += b_out[n, 0, :output_dim]

    return (jnp.asarray(w_stack, dtype=weight_dtype),
            jnp.asarray(b_stack, dtype=jnp.float32),
            P, input_dim, num_net, L)


def make_bootstrap_ensemble_forward(params, output_dim,
                                    compute_dtype=jnp.bfloat16):
    """Pack once; return a jitted forward(x) -> (batch, output_dim)."""
    w_stack, b_stack, P, input_dim, num_net, L = _pack_params_np(
        params, output_dim, compute_dtype)

    kernel = functools.partial(_ensemble_kernel,
                               num_layers=L,
                               inv_num_net=1.0 / num_net,
                               compute_dtype=compute_dtype)

    @jax.jit
    def _forward(x, w_stack, b_stack):
        batch = x.shape[0]
        batch_p = _round_up(max(batch, _SUBLANE), _SUBLANE)
        # lane-dense, sublane-aligned input slab (zeros beyond batch/input_dim)
        x_p = jnp.zeros((batch_p, P), jnp.float32)
        x_p = x_p.at[:batch, :input_dim].set(x.astype(jnp.float32))

        flops = 2 * batch_p * P * P * L
        bytes_accessed = (x_p.size * 4
                          + w_stack.size * jnp.dtype(w_stack.dtype).itemsize
                          + b_stack.size * 4
                          + batch_p * P * 4)

        out = pl.pallas_call(
            kernel,
            out_shape=jax.ShapeDtypeStruct((batch_p, P), jnp.float32),
            # no grid: whole problem resident in VMEM, no pipeline bookkeeping
            in_specs=[pl.BlockSpec(memory_space=pltpu.MemorySpace.VMEM)] * 3,
            out_specs=pl.BlockSpec(memory_space=pltpu.MemorySpace.VMEM),
            cost_estimate=pl.CostEstimate(flops=flops, transcendentals=0,
                                          bytes_accessed=bytes_accessed),
        )(x_p, w_stack, b_stack)
        return out[:batch, :output_dim]

    return lambda x: _forward(x, w_stack, b_stack)


def _reference_forward(x, params, output_dim):
    """Pure-JAX f32 reference mirroring BootstrapEnsemble.forward."""
    w_in, b_in, w_h, b_h, w_out, b_out = params
    num_net = w_in.shape[0]
    hidden_depth = w_h.shape[1]
    means = []
    for n in range(num_net):
        h = jnp.maximum(x @ w_in[n] + b_in[n], 0.0)
        for d in range(hidden_depth):
            h = jnp.maximum(h @ w_h[n, d] + b_h[n, d], 0.0)
        y = h @ w_out[n] + b_out[n]
        means.append(y[:, :output_dim][..., None])
    return jnp.concatenate(means, axis=-1).mean(axis=-1)


if __name__ == "__main__":
    # Small shapes consistent with the module's __init__.
    batch, input_dim, hidden_dim, output_dim = 8, 8, 32, 2
    hidden_depth, num_net = 2, 3

    key = jax.random.PRNGKey(0)
    keys = jax.random.split(key, 7)

    def uinit(k, shape, fan_in):
        # nn.Linear-style init: U[-1/sqrt(fan_in), 1/sqrt(fan_in)]
        bound = 1.0 / math.sqrt(fan_in)
        return jax.random.uniform(k, shape, jnp.float32, -bound, bound)

    x = jax.random.normal(keys[0], (batch, input_dim), jnp.float32)
    w_in = uinit(keys[1], (num_net, input_dim, hidden_dim), input_dim)
    b_in = uinit(keys[2], (num_net, 1, hidden_dim), input_dim)
    w_h = uinit(keys[3], (num_net, hidden_depth, hidden_dim, hidden_dim), hidden_dim)
    b_h = uinit(keys[4], (num_net, hidden_depth, 1, hidden_dim), hidden_dim)
    w_out = uinit(keys[5], (num_net, hidden_dim, 2 * output_dim), hidden_dim)
    b_out = uinit(keys[6], (num_net, 1, 2 * output_dim), hidden_dim)

    params = (w_in, b_in, w_h, b_h, w_out, b_out)

    # One-time packing (not in the per-call path), then call the kernel.
    forward = make_bootstrap_ensemble_forward(params, output_dim)
    out = jax.block_until_ready(forward(x))

    ref = _reference_forward(x, params, output_dim)
    assert out.shape == (batch, output_dim)
    # bf16 MXU operands with f32 accumulation vs pure-f32 reference.
    assert jnp.allclose(out, ref, atol=2e-2, rtol=2e-2), (out, ref)

    print("KERNEL_OK")
</pallas_src>

<mosaic_0001>
module attributes {stable_mosaic.version = 11 : i64} {
  func.func @_ensemble_kernel(%arg0: memref<8x128xf32, #tpu.memory_space<vmem>>, %arg1: memref<4x128x128xbf16, #tpu.memory_space<vmem>>, %arg2: memref<4x1x128xf32, #tpu.memory_space<vmem>>, %arg3: memref<8x128xf32, #tpu.memory_space<vmem>>) attributes {dimension_semantics = [], scalar_prefetch = 0 : i64, scratch_operands = 0 : i64, tpu.core_type = #tpu.core_type<tc>} {
    %c0 = arith.constant 0 : index
    %c0_0 = arith.constant 0 : index
    %0 = vector.load %arg0[%c0, %c0_0] : memref<8x128xf32, #tpu.memory_space<vmem>>, vector<8x128xf32>
    %1 = arith.truncf %0 : vector<8x128xf32> to vector<8x128xbf16>
    %c0_1 = arith.constant 0 : index
    %c0_2 = arith.constant 0 : index
    %c0_3 = arith.constant 0 : index
    %2 = vector.load %arg1[%c0_1, %c0_2, %c0_3] : memref<4x128x128xbf16, #tpu.memory_space<vmem>>, vector<1x128x128xbf16>
    %3 = vector.shape_cast %2 : vector<1x128x128xbf16> to vector<128x128xbf16>
    %cst = arith.constant dense<0.000000e+00> : vector<8x128xf32>
    %4 = tpu.matmul %1, %3, %cst {dimension_numbers = #tpu.dot_dimension_numbers<[1], [0], [0], [1], [0, 0, 1, 1], [], []>} : vector<8x128xbf16>, vector<128x128xbf16>, vector<8x128xf32> -> vector<8x128xf32>
    %c0_4 = arith.constant 0 : index
    %c0_5 = arith.constant 0 : index
    %c0_6 = arith.constant 0 : index
    %5 = vector.load %arg2[%c0_4, %c0_5, %c0_6] : memref<4x1x128xf32, #tpu.memory_space<vmem>>, vector<1x1x128xf32>
    %6 = vector.shape_cast %5 : vector<1x1x128xf32> to vector<1x128xf32>
    %7 = vector.broadcast %6 : vector<1x128xf32> to vector<8x128xf32>
    %8 = arith.addf %4, %7 : vector<8x128xf32>
    %cst_7 = arith.constant 0.000000e+00 : f32
    %9 = vector.broadcast %cst_7 : f32 to vector<8x128xf32>
    %10 = arith.maximumf %8, %9 : vector<8x128xf32>
    %11 = arith.truncf %10 : vector<8x128xf32> to vector<8x128xbf16>
    %c1 = arith.constant 1 : index
    %c0_8 = arith.constant 0 : index
    %c0_9 = arith.constant 0 : index
    %12 = vector.load %arg1[%c1, %c0_8, %c0_9] : memref<4x128x128xbf16, #tpu.memory_space<vmem>>, vector<1x128x128xbf16>
    %13 = vector.shape_cast %12 : vector<1x128x128xbf16> to vector<128x128xbf16>
    %cst_10 = arith.constant dense<0.000000e+00> : vector<8x128xf32>
    %14 = tpu.matmul %11, %13, %cst_10 {dimension_numbers = #tpu.dot_dimension_numbers<[1], [0], [0], [1], [0, 0, 1, 1], [], []>} : vector<8x128xbf16>, vector<128x128xbf16>, vector<8x128xf32> -> vector<8x128xf32>
    %c1_11 = arith.constant 1 : index
    %c0_12 = arith.constant 0 : index
    %c0_13 = arith.constant 0 : index
    %15 = vector.load %arg2[%c1_11, %c0_12, %c0_13] : memref<4x1x128xf32, #tpu.memory_space<vmem>>, vector<1x1x128xf32>
    %16 = vector.shape_cast %15 : vector<1x1x128xf32> to vector<1x128xf32>
    %17 = vector.broadcast %16 : vector<1x128xf32> to vector<8x128xf32>
    %18 = arith.addf %14, %17 : vector<8x128xf32>
    %cst_14 = arith.constant 0.000000e+00 : f32
    %19 = vector.broadcast %cst_14 : f32 to vector<8x128xf32>
    %20 = arith.maximumf %18, %19 : vector<8x128xf32>
    %21 = arith.truncf %20 : vector<8x128xf32> to vector<8x128xbf16>
    %c2 = arith.constant 2 : index
    %c0_15 = arith.constant 0 : index
    %c0_16 = arith.constant 0 : index
    %22 = vector.load %arg1[%c2, %c0_15, %c0_16] : memref<4x128x128xbf16, #tpu.memory_space<vmem>>, vector<1x128x128xbf16>
    %23 = vector.shape_cast %22 : vector<1x128x128xbf16> to vector<128x128xbf16>
    %cst_17 = arith.constant dense<0.000000e+00> : vector<8x128xf32>
    %24 = tpu.matmul %21, %23, %cst_17 {dimension_numbers = #tpu.dot_dimension_numbers<[1], [0], [0], [1], [0, 0, 1, 1], [], []>} : vector<8x128xbf16>, vector<128x128xbf16>, vector<8x128xf32> -> vector<8x128xf32>
    %c2_18 = arith.constant 2 : index
    %c0_19 = arith.constant 0 : index
    %c0_20 = arith.constant 0 : index
    %25 = vector.load %arg2[%c2_18, %c0_19, %c0_20] : memref<4x1x128xf32, #tpu.memory_space<vmem>>, vector<1x1x128xf32>
    %26 = vector.shape_cast %25 : vector<1x1x128xf32> to vector<1x128xf32>
    %27 = vector.broadcast %26 : vector<1x128xf32> to vector<8x128xf32>
    %28 = arith.addf %24, %27 : vector<8x128xf32>
    %cst_21 = arith.constant 0.000000e+00 : f32
    %29 = vector.broadcast %cst_21 : f32 to vector<8x128xf32>
    %30 = arith.maximumf %28, %29 : vector<8x128xf32>
    %31 = arith.truncf %30 : vector<8x128xf32> to vector<8x128xbf16>
    %c3 = arith.constant 3 : index
    %c0_22 = arith.constant 0 : index
    %c0_23 = arith.constant 0 : index
    %32 = vector.load %arg1[%c3, %c0_22, %c0_23] : memref<4x128x128xbf16, #tpu.memory_space<vmem>>, vector<1x128x128xbf16>
    %33 = vector.shape_cast %32 : vector<1x128x128xbf16> to vector<128x128xbf16>
    %cst_24 = arith.constant dense<0.000000e+00> : vector<8x128xf32>
    %34 = tpu.matmul %31, %33, %cst_24 {dimension_numbers = #tpu.dot_dimension_numbers<[1], [0], [0], [1], [0, 0, 1, 1], [], []>} : vector<8x128xbf16>, vector<128x128xbf16>, vector<8x128xf32> -> vector<8x128xf32>
    %c3_25 = arith.constant 3 : index
    %c0_26 = arith.constant 0 : index
    %c0_27 = arith.constant 0 : index
    %35 = vector.load %arg2[%c3_25, %c0_26, %c0_27] : memref<4x1x128xf32, #tpu.memory_space<vmem>>, vector<1x1x128xf32>
    %36 = vector.shape_cast %35 : vector<1x1x128xf32> to vector<1x128xf32>
    %37 = vector.broadcast %36 : vector<1x128xf32> to vector<8x128xf32>
    %38 = arith.addf %34, %37 : vector<8x128xf32>
    %cst_28 = arith.constant 0.333333343 : f32
    %39 = vector.broadcast %cst_28 : f32 to vector<8x128xf32>
    %40 = arith.mulf %38, %39 : vector<8x128xf32>
    %c0_29 = arith.constant 0 : index
    %c0_30 = arith.constant 0 : index
    %41 = vector.load %arg3[%c0_29, %c0_30] : memref<8x128xf32, #tpu.memory_space<vmem>>, vector<8x128xf32>
    tpu.vector_store %arg3[%c0_29, %c0_30], %40 {strides = array<i32>} : memref<8x128xf32, #tpu.memory_space<vmem>>, vector<8x128xf32>,
    return
  }
}

</mosaic_0001>

<llo_original>
// kernel: _forward.1
$region0: #{_forward.1}
  #allocation0 [shape = 'u32[]', space=smem, size = 0x4, offset = 0x4, fixed_abs, tag = 'smem constant byte address 0x4 - core index']
  #allocation1 [shape = 'u32[144,128]{1,0:T(1,128)}', space=vmem, size = 0x12000, scoped, tag = 'internal scratch']
  %s0 = inlined_call_operand.vmem [shape: f32[8,128], index: 0, kind: input, shape index: {}]
  %s1 = inlined_call_operand.hbm [shape: bf16[4,128,128], index: 1, kind: input, shape index: {}]
  %s2 = inlined_call_operand.vmem [shape: f32[4,1,128], index: 2, kind: input, shape index: {}]
  %s3 = inlined_call_operand.vmem [shape: f32[8,128], index: 3, kind: output, shape index: {}]
  %s4 = sld [smem:[#allocation0]]
  $region26: #{_forward.1} parent=0
    _
  %s6 = ssub.s32 1, %s4
  %s7 = scalar_select 0, %s6, %s4
  $region1: #{_forward.1} parent=0
    #allocation2 [shape = 'u8[131072]{0}', space=vmem, size = 0x20000, scoped, tag = 'input window, operand 1, single buffered']
    #allocation3 [shape = 's32[1]{0}', space=sflag, size = 0x4, scoped, tag = 'scoped memory for _forward.1']
    %8 = vsyncpa [#allocation3], 0
    // Predicated region
    $region2: #{_forward.1} parent=1 // pred_check
      _
    $region3: #{_forward.1} parent=1 // pred_check_branch
      %10 = sbr.rel (0) target = $region5
    $region4: #{_forward.1} parent=1 // pred_region
      _
    $region5: #{_forward.1} parent=1 // pred_fallthru
      _
    // Predicated region
    $region6: #{_forward.1} parent=1 // pred_check
      _
    $region7: #{_forward.1} parent=1 // pred_check_branch
      %12 = sbr.rel (0) target = $region9
    $region8: #{_forward.1} parent=1 // pred_region
      %s14 = ssub.s32 4096, 4096
      %15 = vsyncadd [#allocation3], %s14
      %s16 = sshll.u32 [#allocation2], 4
      %s17 = int_to_ptr.vmem [resolvable:$true] %s16
      %22 = dma.hbm_to_vmem [thread:$0]  %s1, 4096, %s17, [#allocation3], 64, 64, 4
    $region9: #{_forward.1} parent=1 // pred_fallthru
      _
    // Predicated region
    $region10: #{_forward.1} parent=1 // pred_check
      _
    $region11: #{_forward.1} parent=1 // pred_check_branch
      %24 = sbr.rel (0) target = $region13
    $region12: #{_forward.1} parent=1 // pred_region
      _
    $region13: #{_forward.1} parent=1 // pred_fallthru
      _
    // Predicated region
    $region14: #{_forward.1} parent=1 // pred_check
      _
    $region15: #{_forward.1} parent=1 // pred_check_branch
      %26 = sbr.rel (0) target = $region17
    $region16: #{_forward.1} parent=1 // pred_region
      %27 = dma.done [#allocation3], 4096
    $region17: #{_forward.1} parent=1 // pred_fallthru
      _
    %v29 = vld [vmem:[%s0] sm:$0xff]
    %v30 = vpack.c.bf16 %v29, %v29
    %v31 = vld [vmem:[#allocation2] sm:$0xf]
    %v32 = vld [vmem:[#allocation2 + $0x4] sm:$0xf]
    %v33 = vld [vmem:[#allocation2 + $0x8] sm:$0xf]
    %v34 = vld [vmem:[#allocation2 + $0xc] sm:$0xf]
    %v35 = vld [vmem:[#allocation2 + $0x10] sm:$0xf]
    %v36 = vld [vmem:[#allocation2 + $0x14] sm:$0xf]
    %v37 = vld [vmem:[#allocation2 + $0x18] sm:$0xf]
    %v38 = vld [vmem:[#allocation2 + $0x1c] sm:$0xf]
    %v39 = vld [vmem:[#allocation2 + $0x20] sm:$0xf]
    %v40 = vld [vmem:[#allocation2 + $0x24] sm:$0xf]
    %v41 = vld [vmem:[#allocation2 + $0x28] sm:$0xf]
    %v42 = vld [vmem:[#allocation2 + $0x2c] sm:$0xf]
    %v43 = vld [vmem:[#allocation2 + $0x30] sm:$0xf]
    %v44 = vld [vmem:[#allocation2 + $0x34] sm:$0xf]
    %v45 = vld [vmem:[#allocation2 + $0x38] sm:$0xf]
    %v46 = vld [vmem:[#allocation2 + $0x3c] sm:$0xf]
    %v47 = vld [vmem:[%s2] sm:$0x1]
    %v49 = vlaneseq
    %v50 = vshrl.u32 %v49, 7
    %v51 = vsub.s32 0, %v50
    %v52 = vrot.slane %v47, %v51
    %v70 = vunpack.c.l.b16 %v31
    %v71 = vunpack.c.l.b16 %v32
    %v72 = vunpack.c.l.b16 %v33
    %v73 = vunpack.c.l.b16 %v34
    %v74 = vunpack.c.l.b16 %v35
    %v75 = vunpack.c.l.b16 %v36
    %v76 = vunpack.c.l.b16 %v37
    %v77 = vunpack.c.l.b16 %v38
    %v78 = vunpack.c.l.b16 %v39
    %v79 = vunpack.c.l.b16 %v40
    %v80 = vunpack.c.l.b16 %v41
    %v81 = vunpack.c.l.b16 %v42
    %v82 = vunpack.c.l.b16 %v43
    %v83 = vunpack.c.l.b16 %v44
    %v84 = vunpack.c.l.b16 %v45
    %v85 = vunpack.c.l.b16 %v46
    %v86 = vpack.c.b16 %v71, %v70
    %v87 = vpack.c.b16 %v73, %v72
    %v88 = vpack.c.b16 %v75, %v74
    %v89 = vpack.c.b16 %v77, %v76
    %v90 = vpack.c.b16 %v79, %v78
    %v91 = vpack.c.b16 %v81, %v80
    %v92 = vpack.c.b16 %v83, %v82
    %v93 = vpack.c.b16 %v85, %v84
    %102 = vmatprep.subr.bf16.mxu0 0
    %103 = vmatpush1.bf16.msra.mxu0 %v86
    %104 = vmatprep.subr.bf16.mxu0 0
    %105 = vmatpush1.bf16.msra.mxu0 %v87
    %106 = vmatprep.subr.bf16.mxu0 0
    %107 = vmatpush1.bf16.msra.mxu0 %v88
    %108 = vmatprep.subr.bf16.mxu0 0
    %109 = vmatpush1.bf16.msra.mxu0 %v89
    %110 = vmatprep.subr.bf16.mxu0 0
    %111 = vmatpush1.bf16.msra.mxu0 %v90
    %112 = vmatprep.subr.bf16.mxu0 0
    %113 = vmatpush1.bf16.msra.mxu0 %v91
    %114 = vmatprep.subr.bf16.mxu0 0
    %115 = vmatpush1.bf16.msra.mxu0 %v92
    %116 = vmatprep.subr.bf16.mxu0 0
    %117 = vmatpush1.bf16.msra.mxu0 %v93
    %118 = vmatprep.subr.bf16.mxu0 0
    %119 = vmatpush1.bf16.msra.mxu0 0
    %120 = vmatprep.subr.bf16.mxu0 0
    %121 = vmatpush1.bf16.msra.mxu0 0
    %122 = vmatprep.subr.bf16.mxu0 0
    %123 = vmatpush1.bf16.msra.mxu0 0
    %124 = vmatprep.subr.bf16.mxu0 0
    %125 = vmatpush1.bf16.msra.mxu0 0
    %126 = vmatprep.subr.bf16.mxu0 0
    %127 = vmatpush1.bf16.msra.mxu0 0
    %128 = vmatprep.subr.bf16.mxu0 0
    %129 = vmatpush1.bf16.msra.mxu0 0
    %130 = vmatprep.subr.bf16.mxu0 0
    %131 = vmatpush1.bf16.msra.mxu0 0
    %132 = vmatprep.subr.bf16.mxu0 0
    %133 = vmatpush1.bf16.msra.mxu0 0
    %134 = vmatprep.mubr.bf16.mxu0 0
    %135 = vmatmul.mubr.bf16.gmra.mrb[0].mxu0 %v30
    %v136 = vpop.f32.mrb[0].mxu0
    %v137 = vadd.f32 %v52, %v136
    %v138 = vpop.f32.mrb[0].mxu0
    %v139 = vpop.f32.mrb[0].mxu0
    %v140 = vpop.f32.mrb[0].mxu0
    %141 = vdwg.mxu0
    %v142 = vmax.f32 %v137, 0.0
    %v143 = vpack.c.bf16 %v142, %v142
    %s144 = scalar_lea.vmem [#allocation2], 64
    %v145 = vld [vmem:[%s144] sm:$0xf]
    %v146 = vld [vmem:[%s144 + $0x4] sm:$0xf]
    %v147 = vld [vmem:[%s144 + $0x8] sm:$0xf]
    %v148 = vld [vmem:[%s144 + $0xc] sm:$0xf]
    %v149 = vld [vmem:[%s144 + $0x10] sm:$0xf]
    %v150 = vld [vmem:[%s144 + $0x14] sm:$0xf]
    %v151 = vld [vmem:[%s144 + $0x18] sm:$0xf]
    %v152 = vld [vmem:[%s144 + $0x1c] sm:$0xf]
    %v153 = vld [vmem:[%s144 + $0x20] sm:$0xf]
    %v154 = vld [vmem:[%s144 + $0x24] sm:$0xf]
    %v155 = vld [vmem:[%s144 + $0x28] sm:$0xf]
    %v156 = vld [vmem:[%s144 + $0x2c] sm:$0xf]
    %v157 = vld [vmem:[%s144 + $0x30] sm:$0xf]
    %v158 = vld [vmem:[%s144 + $0x34] sm:$0xf]
    %v159 = vld [vmem:[%s144 + $0x38] sm:$0xf]
    %v160 = vld [vmem:[%s144 + $0x3c] sm:$0xf]
    %s161 = scalar_lea.vmem %s2, 1
    %v162 = vld [vmem:[%s161] sm:$0x1]
    %v164 = vlaneseq
    %v165 = vshrl.u32 %v164, 7
    %v166 = vsub.s32 0, %v165
    %v167 = vrot.slane %v162, %v166
    %v185 = vunpack.c.l.b16 %v145
    %v186 = vunpack.c.l.b16 %v146
    %v187 = vunpack.c.l.b16 %v147
    %v188 = vunpack.c.l.b16 %v148
    %v189 = vunpack.c.l.b16 %v149
    %v190 = vunpack.c.l.b16 %v150
    %v191 = vunpack.c.l.b16 %v151
    %v192 = vunpack.c.l.b16 %v152
    %v193 = vunpack.c.l.b16 %v153
    %v194 = vunpack.c.l.b16 %v154
    %v195 = vunpack.c.l.b16 %v155
    %v196 = vunpack.c.l.b16 %v156
    %v197 = vunpack.c.l.b16 %v157
    %v198 = vunpack.c.l.b16 %v158
    %v199 = vunpack.c.l.b16 %v159
    %v200 = vunpack.c.l.b16 %v160
    %v201 = vpack.c.b16 %v186, %v185
    %v202 = vpack.c.b16 %v188, %v187
    %v203 = vpack.c.b16 %v190, %v189
    %v204 = vpack.c.b16 %v192, %v191
    %v205 = vpack.c.b16 %v194, %v193
    %v206 = vpack.c.b16 %v196, %v195
    %v207 = vpack.c.b16 %v198, %v197
    %v208 = vpack.c.b16 %v200, %v199
    %217 = vmatprep.subr.bf16.mxu0 0
    %218 = vmatpush1.bf16.msra.mxu0 %v201
    %219 = vmatprep.subr.bf16.mxu0 0
    %220 = vmatpush1.bf16.msra.mxu0 %v202
    %221 = vmatprep.subr.bf16.mxu0 0
    %222 = vmatpush1.bf16.msra.mxu0 %v203
    %223 = vmatprep.subr.bf16.mxu0 0
    %224 = vmatpush1.bf16.msra.mxu0 %v204
    %225 = vmatprep.subr.bf16.mxu0 0
    %226 = vmatpush1.bf16.msra.mxu0 %v205
    %227 = vmatprep.subr.bf16.mxu0 0
    %228 = vmatpush1.bf16.msra.mxu0 %v206
    %229 = vmatprep.subr.bf16.mxu0 0
    %230 = vmatpush1.bf16.msra.mxu0 %v207
    %231 = vmatprep.subr.bf16.mxu0 0
    %232 = vmatpush1.bf16.msra.mxu0 %v208
    %233 = vmatprep.subr.bf16.mxu0 0
    %234 = vmatpush1.bf16.msra.mxu0 0
    %235 = vmatprep.subr.bf16.mxu0 0
    %236 = vmatpush1.bf16.msra.mxu0 0
    %237 = vmatprep.subr.bf16.mxu0 0
    %238 = vmatpush1.bf16.msra.mxu0 0
    %239 = vmatprep.subr.bf16.mxu0 0
    %240 = vmatpush1.bf16.msra.mxu0 0
    %241 = vmatprep.subr.bf16.mxu0 0
    %242 = vmatpush1.bf16.msra.mxu0 0
    %243 = vmatprep.subr.bf16.mxu0 0
    %244 = vmatpush1.bf16.msra.mxu0 0
    %245 = vmatprep.subr.bf16.mxu0 0
    %246 = vmatpush1.bf16.msra.mxu0 0
    %247 = vmatprep.subr.bf16.mxu0 0
    %248 = vmatpush1.bf16.msra.mxu0 0
    %249 = vmatprep.mubr.bf16.mxu0 0
    %250 = vmatmul.mubr.bf16.gmra.mrb[0].mxu0 %v143
    %v251 = vpop.f32.mrb[0].mxu0
    %v252 = vadd.f32 %v167, %v251
    %v253 = vpop.f32.mrb[0].mxu0
    %v254 = vpop.f32.mrb[0].mxu0
    %v255 = vpop.f32.mrb[0].mxu0
    %256 = vdwg.mxu0
    %v257 = vmax.f32 %v252, 0.0
    %v258 = vpack.c.bf16 %v257, %v257
    %s259 = scalar_lea.vmem [#allocation2], 128
    %v260 = vld [vmem:[%s259] sm:$0xf]
    %v261 = vld [vmem:[%s259 + $0x4] sm:$0xf]
    %v262 = vld [vmem:[%s259 + $0x8] sm:$0xf]
    %v263 = vld [vmem:[%s259 + $0xc] sm:$0xf]
    %v264 = vld [vmem:[%s259 + $0x10] sm:$0xf]
    %v265 = vld [vmem:[%s259 + $0x14] sm:$0xf]
    %v266 = vld [vmem:[%s259 + $0x18] sm:$0xf]
    %v267 = vld [vmem:[%s259 + $0x1c] sm:$0xf]
    %v268 = vld [vmem:[%s259 + $0x20] sm:$0xf]
    %v269 = vld [vmem:[%s259 + $0x24] sm:$0xf]
    %v270 = vld [vmem:[%s259 + $0x28] sm:$0xf]
    %v271 = vld [vmem:[%s259 + $0x2c] sm:$0xf]
    %v272 = vld [vmem:[%s259 + $0x30] sm:$0xf]
    %v273 = vld [vmem:[%s259 + $0x34] sm:$0xf]
    %v274 = vld [vmem:[%s259 + $0x38] sm:$0xf]
    %v275 = vld [vmem:[%s259 + $0x3c] sm:$0xf]
    %s276 = scalar_lea.vmem %s2, 2
    %v277 = vld [vmem:[%s276] sm:$0x1]
    %v279 = vlaneseq
    %v280 = vshrl.u32 %v279, 7
    %v281 = vsub.s32 0, %v280
    %v282 = vrot.slane %v277, %v281
    %v300 = vunpack.c.l.b16 %v260
    %v301 = vunpack.c.l.b16 %v261
    %v302 = vunpack.c.l.b16 %v262
    %v303 = vunpack.c.l.b16 %v263
    %v304 = vunpack.c.l.b16 %v264
    %v305 = vunpack.c.l.b16 %v265
    %v306 = vunpack.c.l.b16 %v266
    %v307 = vunpack.c.l.b16 %v267
    %v308 = vunpack.c.l.b16 %v268
    %v309 = vunpack.c.l.b16 %v269
    %v310 = vunpack.c.l.b16 %v270
    %v311 = vunpack.c.l.b16 %v271
    %v312 = vunpack.c.l.b16 %v272
    %v313 = vunpack.c.l.b16 %v273
    %v314 = vunpack.c.l.b16 %v274
    %v315 = vunpack.c.l.b16 %v275
    %v316 = vpack.c.b16 %v301, %v300
    %v317 = vpack.c.b16 %v303, %v302
    %v318 = vpack.c.b16 %v305, %v304
    %v319 = vpack.c.b16 %v307, %v306
    %v320 = vpack.c.b16 %v309, %v308
    %v321 = vpack.c.b16 %v311, %v310
    %v322 = vpack.c.b16 %v313, %v312
    %v323 = vpack.c.b16 %v315, %v314
    %332 = vmatprep.subr.bf16.mxu0 0
    %333 = vmatpush1.bf16.msra.mxu0 %v316
    %334 = vmatprep.subr.bf16.mxu0 0
    %335 = vmatpush1.bf16.msra.mxu0 %v317
    %336 = vmatprep.subr.bf16.mxu0 0
    %337 = vmatpush1.bf16.msra.mxu0 %v318
    %338 = vmatprep.subr.bf16.mxu0 0
    %339 = vmatpush1.bf16.msra.mxu0 %v319
    %340 = vmatprep.subr.bf16.mxu0 0
    %341 = vmatpush1.bf16.msra.mxu0 %v320
    %342 = vmatprep.subr.bf16.mxu0 0
    %343 = vmatpush1.bf16.msra.mxu0 %v321
    %344 = vmatprep.subr.bf16.mxu0 0
    %345 = vmatpush1.bf16.msra.mxu0 %v322
    %346 = vmatprep.subr.bf16.mxu0 0
    %347 = vmatpush1.bf16.msra.mxu0 %v323
    %348 = vmatprep.subr.bf16.mxu0 0
    %349 = vmatpush1.bf16.msra.mxu0 0
    %350 = vmatprep.subr.bf16.mxu0 0
    %351 = vmatpush1.bf16.msra.mxu0 0
    %352 = vmatprep.subr.bf16.mxu0 0
    %353 = vmatpush1.bf16.msra.mxu0 0
    %354 = vmatprep.subr.bf16.mxu0 0
    %355 = vmatpush1.bf16.msra.mxu0 0
    %356 = vmatprep.subr.bf16.mxu0 0
    %357 = vmatpush1.bf16.msra.mxu0 0
    %358 = vmatprep.subr.bf16.mxu0 0
    %359 = vmatpush1.bf16.msra.mxu0 0
    %360 = vmatprep.subr.bf16.mxu0 0
    %361 = vmatpush1.bf16.msra.mxu0 0
    %362 = vmatprep.subr.bf16.mxu0 0
    %363 = vmatpush1.bf16.msra.mxu0 0
    %364 = vmatprep.mubr.bf16.mxu0 0
    %365 = vmatmul.mubr.bf16.gmra.mrb[0].mxu0 %v258
    %v366 = vpop.f32.mrb[0].mxu0
    %v367 = vadd.f32 %v282, %v366
    %v368 = vpop.f32.mrb[0].mxu0
    %v369 = vpop.f32.mrb[0].mxu0
    %v370 = vpop.f32.mrb[0].mxu0
    %371 = vdwg.mxu0
    %v372 = vmax.f32 %v367, 0.0
    %v373 = vpack.c.bf16 %v372, %v372
    %s374 = scalar_lea.vmem [#allocation2], 192
    %v375 = vld [vmem:[%s374] sm:$0xf]
    %v376 = vld [vmem:[%s374 + $0x4] sm:$0xf]
    %v377 = vld [vmem:[%s374 + $0x8] sm:$0xf]
    %v378 = vld [vmem:[%s374 + $0xc] sm:$0xf]
    %v379 = vld [vmem:[%s374 + $0x10] sm:$0xf]
    %v380 = vld [vmem:[%s374 + $0x14] sm:$0xf]
    %v381 = vld [vmem:[%s374 + $0x18] sm:$0xf]
    %v382 = vld [vmem:[%s374 + $0x1c] sm:$0xf]
    %v383 = vld [vmem:[%s374 + $0x20] sm:$0xf]
    %v384 = vld [vmem:[%s374 + $0x24] sm:$0xf]
    %v385 = vld [vmem:[%s374 + $0x28] sm:$0xf]
    %v386 = vld [vmem:[%s374 + $0x2c] sm:$0xf]
    %v387 = vld [vmem:[%s374 + $0x30] sm:$0xf]
    %v388 = vld [vmem:[%s374 + $0x34] sm:$0xf]
    %v389 = vld [vmem:[%s374 + $0x38] sm:$0xf]
    %v390 = vld [vmem:[%s374 + $0x3c] sm:$0xf]
    %s391 = scalar_lea.vmem %s2, 3
    %v392 = vld [vmem:[%s391] sm:$0x1]
    %v394 = vlaneseq
    %v395 = vshrl.u32 %v394, 7
    %v396 = vsub.s32 0, %v395
    %v397 = vrot.slane %v392, %v396
    %v415 = vunpack.c.l.b16 %v375
    %v416 = vunpack.c.l.b16 %v376
    %v417 = vunpack.c.l.b16 %v377
    %v418 = vunpack.c.l.b16 %v378
    %v419 = vunpack.c.l.b16 %v379
    %v420 = vunpack.c.l.b16 %v380
    %v421 = vunpack.c.l.b16 %v381
    %v422 = vunpack.c.l.b16 %v382
    %v423 = vunpack.c.l.b16 %v383
    %v424 = vunpack.c.l.b16 %v384
    %v425 = vunpack.c.l.b16 %v385
    %v426 = vunpack.c.l.b16 %v386
    %v427 = vunpack.c.l.b16 %v387
    %v428 = vunpack.c.l.b16 %v388
    %v429 = vunpack.c.l.b16 %v389
    %v430 = vunpack.c.l.b16 %v390
    %v431 = vpack.c.b16 %v416, %v415
    %v432 = vpack.c.b16 %v418, %v417
    %v433 = vpack.c.b16 %v420, %v419
    %v434 = vpack.c.b16 %v422, %v421
    %v435 = vpack.c.b16 %v424, %v423
    %v436 = vpack.c.b16 %v426, %v425
    %v437 = vpack.c.b16 %v428, %v427
    %v438 = vpack.c.b16 %v430, %v429
    %447 = vmatprep.subr.bf16.mxu0 0
    %448 = vmatpush1.bf16.msra.mxu0 %v431
    %449 = vmatprep.subr.bf16.mxu0 0
    %450 = vmatpush1.bf16.msra.mxu0 %v432
    %451 = vmatprep.subr.bf16.mxu0 0
    %452 = vmatpush1.bf16.msra.mxu0 %v433
    %453 = vmatprep.subr.bf16.mxu0 0
    %454 = vmatpush1.bf16.msra.mxu0 %v434
    %455 = vmatprep.subr.bf16.mxu0 0
    %456 = vmatpush1.bf16.msra.mxu0 %v435
    %457 = vmatprep.subr.bf16.mxu0 0
    %458 = vmatpush1.bf16.msra.mxu0 %v436
    %459 = vmatprep.subr.bf16.mxu0 0
    %460 = vmatpush1.bf16.msra.mxu0 %v437
    %461 = vmatprep.subr.bf16.mxu0 0
    %462 = vmatpush1.bf16.msra.mxu0 %v438
    %463 = vmatprep.subr.bf16.mxu0 0
    %464 = vmatpush1.bf16.msra.mxu0 0
    %465 = vmatprep.subr.bf16.mxu0 0
    %466 = vmatpush1.bf16.msra.mxu0 0
    %467 = vmatprep.subr.bf16.mxu0 0
    %468 = vmatpush1.bf16.msra.mxu0 0
    %469 = vmatprep.subr.bf16.mxu0 0
    %470 = vmatpush1.bf16.msra.mxu0 0
    %471 = vmatprep.subr.bf16.mxu0 0
    %472 = vmatpush1.bf16.msra.mxu0 0
    %473 = vmatprep.subr.bf16.mxu0 0
    %474 = vmatpush1.bf16.msra.mxu0 0
    %475 = vmatprep.subr.bf16.mxu0 0
    %476 = vmatpush1.bf16.msra.mxu0 0
    %477 = vmatprep.subr.bf16.mxu0 0
    %478 = vmatpush1.bf16.msra.mxu0 0
    %479 = vmatprep.mubr.bf16.mxu0 0
    %480 = vmatmul.mubr.bf16.gmra.mrb[0].mxu0 %v373
    %v481 = vpop.f32.mrb[0].mxu0
    %v482 = vadd.f32 %v397, %v481
    %v483 = vpop.f32.mrb[0].mxu0
    %v484 = vpop.f32.mrb[0].mxu0
    %v485 = vpop.f32.mrb[0].mxu0
    %486 = vdwg.mxu0
    %v487 = vmul.f32 %v482, 0.33333334
    %488 = vst [vmem:[%s3] sm:$0xff] %v487
    // Predicated region
    $region18: #{_forward.1} parent=1 // pred_check
      _
    $region19: #{_forward.1} parent=1 // pred_check_branch
      %490 = sbr.rel (0) target = $region21
    $region20: #{_forward.1} parent=1 // pred_region
      _
    $region21: #{_forward.1} parent=1 // pred_fallthru
      _
    // Predicated region
    $region22: #{_forward.1} parent=1 // pred_check
      _
    $region23: #{_forward.1} parent=1 // pred_check_branch
      %492 = sbr.rel (0) target = $region25
    $region24: #{_forward.1} parent=1 // pred_region
      _
    $region25: #{_forward.1} parent=1 // pred_fallthru
      _
    %493 = vsyncpa [#allocation3], 1

</llo_original>
